<compile_context>
chip_gen: v6e
topology: v6e:2x2x1
jax: 0.10.0
libtpu: 0.0.40
codegen_flags: <defaults>
</compile_context>

<pallas_src>
import jax
import jax.numpy as jnp
from jax import lax
from jax.experimental import pallas as pl
from jax.experimental.pallas import tpu as pltpu


def _massh_kernel(x_ref, ws_ref, bs_ref, wf_ref, bf_ref, o_ref):
    # x_ref:  (B*C, HW)  f32  -- HW on lanes (dense), batches stacked on sublanes
    # ws_ref: (F, C)     f32  -- stem (1x1 conv) weight
    # bs_ref: (F, 1)     f32  -- stem bias (column)
    # wf_ref: (T, F)     f32  -- fc weight, PyTorch (out, in) layout
    # bf_ref: (1, T)     f32  -- fc bias (row)
    # o_ref:  (B, T)     f32  -- logits, caller layout (no wrapper transpose)
    f_n, c_in = ws_ref.shape
    b_n = x_ref.shape[0] // c_in

    # Hoisted loads: emitted once, reused by every batch iteration.
    w_stem = ws_ref[...]                                           # (F, C)
    b_stem = bs_ref[...]                                           # (F, 1)

    feat_cols = []
    for b in range(b_n):                   # B tiny -> static unroll is cheapest
        x_b = x_ref[pl.ds(b * c_in, c_in), :]                      # (C, HW) static slice
        # Stem 1x1 conv as C_in unrolled VPU FMAs (C_in << MXU depth, so the
        # MXU push/pop latency of a K=4 matmul is not worth paying).
        h = w_stem[:, 0:1] * x_b[0:1, :]                           # (F, HW)
        for c in range(1, c_in):
            h = h + w_stem[:, c:c + 1] * x_b[c:c + 1, :]
        h = jnp.maximum(h + b_stem, 0.0)                           # bias + ReLU, f32
        # Global average pool over the lane (spatial) axis.
        feat_cols.append(jnp.mean(h, axis=-1, keepdims=True))      # (F, 1)

    feat = jnp.concatenate(feat_cols, axis=1)                      # (F, B)
    # fc head contracting F: (F, B) x (T, F) -> (B, T) directly, f32 accumulate.
    out = lax.dot_general(feat, wf_ref[...],
                          dimension_numbers=(((0,), (1,)), ((), ())),
                          preferred_element_type=jnp.float32)      # (B, T)
    o_ref[...] = (out + bf_ref[...]).astype(o_ref.dtype)


def massh_forward(image_nchw, params):
    """image_nchw: (B, C, H, W) float32; returns (B, target_size) float32."""
    w_stem, b_stem, w_fc, b_fc = params
    B, C, H, W = image_nchw.shape
    HW = H * W
    F = w_stem.shape[0]
    T = w_fc.shape[0]

    # (B, C, H, W) -> (B*C, HW): pure reshape, no HBM relayout, no dtype cast.
    x = image_nchw.reshape(B * C, HW)
    bs = b_stem.reshape(F, 1)
    bf = b_fc.reshape(1, T)

    cost = pl.CostEstimate(
        flops=2 * B * HW * C * F + 2 * B * F * T,
        transcendentals=0,
        bytes_accessed=4 * (x.size + w_stem.size + w_fc.size
                            + bs.size + bf.size + B * T),
    )

    return pl.pallas_call(
        _massh_kernel,
        out_shape=jax.ShapeDtypeStruct((B, T), jnp.float32),
        grid_spec=pltpu.PrefetchScalarGridSpec(
            num_scalar_prefetch=0,
            grid=(1,),                                  # whole tiny problem in one step
            in_specs=[
                pl.BlockSpec((B * C, HW), lambda i: (0, 0)),   # full batch slab
                pl.BlockSpec((F, C), lambda i: (0, 0)),        # stem weight
                pl.BlockSpec((F, 1), lambda i: (0, 0)),        # stem bias
                pl.BlockSpec((T, F), lambda i: (0, 0)),        # fc weight
                pl.BlockSpec((1, T), lambda i: (0, 0)),        # fc bias
            ],
            out_specs=pl.BlockSpec((B, T), lambda i: (0, 0)),
        ),
        compiler_params=pltpu.CompilerParams(
            dimension_semantics=("arbitrary",)),
        cost_estimate=cost,
    )(x, w_stem, bs, w_fc, bf)


def init_params(key, c_in, n_features, target_size):
    k1, k2, k3, k4 = jax.random.split(key, 4)
    # Stem weight in (out_features, in_channels) layout -> used directly as (F, C).
    w_stem = jax.random.normal(k1, (n_features, c_in), jnp.float32) * 0.1
    b_stem = jax.random.normal(k2, (n_features,), jnp.float32) * 0.01
    # fc weight kept in PyTorch nn.Linear (out, in) layout -> used directly as (T, F).
    w_fc = jax.random.normal(k3, (target_size, n_features), jnp.float32) * 0.1
    b_fc = jax.random.normal(k4, (target_size,), jnp.float32) * 0.01
    return w_stem, b_stem, w_fc, b_fc


if __name__ == "__main__":
    key = jax.random.PRNGKey(0)
    kx, kp = jax.random.split(key)

    B, C, H, W = 2, 4, 16, 16       # small NCHW input
    n_features = 32                 # synthetic backbone feature width
    target_size = 8                 # cfg.target_size

    image = jax.random.normal(kx, (B, C, H, W), jnp.float32)
    params = init_params(kp, C, n_features, target_size)

    out = massh_forward(image, params)
    out = jax.block_until_ready(out)

    # Pure-JAX f32 reference (same arithmetic, same dtypes).
    w_stem, b_stem, w_fc, b_fc = params
    hp = jax.lax.Precision.HIGHEST
    xr = image.reshape(B, C, H * W)
    h = jnp.einsum("fc,bcs->bfs", w_stem, xr, precision=hp)
    h = jnp.maximum(h + b_stem[None, :, None], 0.0)
    feat = jnp.mean(h, axis=-1)                                    # (B, F)
    ref = jnp.einsum("bf,tf->bt", feat, w_fc, precision=hp) + b_fc[None, :]

    assert out.shape == (B, target_size)
    assert jnp.allclose(out, ref, atol=1e-4, rtol=1e-4), (out, ref)

    print("KERNEL_OK")
</pallas_src>

<mosaic_0001>
module attributes {stable_mosaic.version = 11 : i64} {
  func.func @_massh_kernel(%arg0: i32, %arg1: memref<8x256xf32, #tpu.memory_space<vmem>>, %arg2: memref<32x4xf32, #tpu.memory_space<vmem>>, %arg3: memref<32x1xf32, #tpu.memory_space<vmem>>, %arg4: memref<8x32xf32, #tpu.memory_space<vmem>>, %arg5: memref<1x8xf32, #tpu.memory_space<vmem>>, %arg6: memref<2x8xf32, #tpu.memory_space<vmem>>) attributes {dimension_semantics = [#tpu.dimension_semantics<arbitrary>], iteration_bounds = array<i64: 1>, scalar_prefetch = 0 : i64, scratch_operands = 0 : i64, tpu.core_type = #tpu.core_type<tc>, window_params = [{pipeline_mode = #tpu.pipeline_mode<synchronous>, transform_indices = @transform_0, window_bounds = array<i64: 8, 256>}, {pipeline_mode = #tpu.pipeline_mode<synchronous>, transform_indices = @transform_1, window_bounds = array<i64: 32, 4>}, {pipeline_mode = #tpu.pipeline_mode<synchronous>, transform_indices = @transform_2, window_bounds = array<i64: 32, 1>}, {pipeline_mode = #tpu.pipeline_mode<synchronous>, transform_indices = @transform_3, window_bounds = array<i64: 8, 32>}, {pipeline_mode = #tpu.pipeline_mode<synchronous>, transform_indices = @transform_4, window_bounds = array<i64: 1, 8>}, {pipeline_mode = #tpu.pipeline_mode<synchronous>, transform_indices = @transform_5, window_bounds = array<i64: 2, 8>}]} {
    %c0 = arith.constant 0 : index
    %c0_0 = arith.constant 0 : index
    %0 = vector.load %arg2[%c0, %c0_0] : memref<32x4xf32, #tpu.memory_space<vmem>>, vector<32x4xf32>
    %c0_1 = arith.constant 0 : index
    %c0_2 = arith.constant 0 : index
    %1 = vector.load %arg3[%c0_1, %c0_2] : memref<32x1xf32, #tpu.memory_space<vmem>>, vector<32x1xf32>
    %c0_3 = arith.constant 0 : index
    %c0_4 = arith.constant 0 : index
    %2 = vector.load %arg1[%c0_3, %c0_4] : memref<8x256xf32, #tpu.memory_space<vmem>>, vector<4x256xf32>
    %3 = vector.extract_strided_slice %0 {offsets = [0, 0], sizes = [32, 1], strides = [1, 1]} : vector<32x4xf32> to vector<32x1xf32>
    %4 = vector.extract_strided_slice %2 {offsets = [0, 0], sizes = [1, 256], strides = [1, 1]} : vector<4x256xf32> to vector<1x256xf32>
    %5 = vector.broadcast %3 : vector<32x1xf32> to vector<32x256xf32>
    %6 = vector.broadcast %4 : vector<1x256xf32> to vector<32x256xf32>
    %7 = arith.mulf %5, %6 : vector<32x256xf32>
    %8 = vector.extract_strided_slice %0 {offsets = [0, 1], sizes = [32, 1], strides = [1, 1]} : vector<32x4xf32> to vector<32x1xf32>
    %9 = vector.extract_strided_slice %2 {offsets = [1, 0], sizes = [1, 256], strides = [1, 1]} : vector<4x256xf32> to vector<1x256xf32>
    %10 = vector.broadcast %8 : vector<32x1xf32> to vector<32x256xf32>
    %11 = vector.broadcast %9 : vector<1x256xf32> to vector<32x256xf32>
    %12 = arith.mulf %10, %11 : vector<32x256xf32>
    %13 = arith.addf %7, %12 : vector<32x256xf32>
    %14 = vector.extract_strided_slice %0 {offsets = [0, 2], sizes = [32, 1], strides = [1, 1]} : vector<32x4xf32> to vector<32x1xf32>
    %15 = vector.extract_strided_slice %2 {offsets = [2, 0], sizes = [1, 256], strides = [1, 1]} : vector<4x256xf32> to vector<1x256xf32>
    %16 = vector.broadcast %14 : vector<32x1xf32> to vector<32x256xf32>
    %17 = vector.broadcast %15 : vector<1x256xf32> to vector<32x256xf32>
    %18 = arith.mulf %16, %17 : vector<32x256xf32>
    %19 = arith.addf %13, %18 : vector<32x256xf32>
    %20 = vector.extract_strided_slice %0 {offsets = [0, 3], sizes = [32, 1], strides = [1, 1]} : vector<32x4xf32> to vector<32x1xf32>
    %21 = vector.extract_strided_slice %2 {offsets = [3, 0], sizes = [1, 256], strides = [1, 1]} : vector<4x256xf32> to vector<1x256xf32>
    %22 = vector.broadcast %20 : vector<32x1xf32> to vector<32x256xf32>
    %23 = vector.broadcast %21 : vector<1x256xf32> to vector<32x256xf32>
    %24 = arith.mulf %22, %23 : vector<32x256xf32>
    %25 = arith.addf %19, %24 : vector<32x256xf32>
    %26 = vector.broadcast %1 : vector<32x1xf32> to vector<32x256xf32>
    %27 = arith.addf %25, %26 : vector<32x256xf32>
    %cst = arith.constant 0.000000e+00 : f32
    %28 = vector.broadcast %cst : f32 to vector<32x256xf32>
    %29 = arith.maximumf %27, %28 : vector<32x256xf32>
    %cst_5 = arith.constant dense<0.000000e+00> : vector<32xf32>
    %30 = vector.multi_reduction <add>, %29, %cst_5 [1] : vector<32x256xf32> to vector<32xf32>
    %31 = vector.shape_cast %30 : vector<32xf32> to vector<32x1xf32>
    %cst_6 = arith.constant 2.560000e+02 : f32
    %32 = vector.broadcast %cst_6 : f32 to vector<32x1xf32>
    %33 = arith.divf %31, %32 : vector<32x1xf32>
    %c4 = arith.constant 4 : index
    %c0_7 = arith.constant 0 : index
    %34 = vector.load %arg1[%c4, %c0_7] : memref<8x256xf32, #tpu.memory_space<vmem>>, vector<4x256xf32>
    %35 = vector.extract_strided_slice %0 {offsets = [0, 0], sizes = [32, 1], strides = [1, 1]} : vector<32x4xf32> to vector<32x1xf32>
    %36 = vector.extract_strided_slice %34 {offsets = [0, 0], sizes = [1, 256], strides = [1, 1]} : vector<4x256xf32> to vector<1x256xf32>
    %37 = vector.broadcast %35 : vector<32x1xf32> to vector<32x256xf32>
    %38 = vector.broadcast %36 : vector<1x256xf32> to vector<32x256xf32>
    %39 = arith.mulf %37, %38 : vector<32x256xf32>
    %40 = vector.extract_strided_slice %0 {offsets = [0, 1], sizes = [32, 1], strides = [1, 1]} : vector<32x4xf32> to vector<32x1xf32>
    %41 = vector.extract_strided_slice %34 {offsets = [1, 0], sizes = [1, 256], strides = [1, 1]} : vector<4x256xf32> to vector<1x256xf32>
    %42 = vector.broadcast %40 : vector<32x1xf32> to vector<32x256xf32>
    %43 = vector.broadcast %41 : vector<1x256xf32> to vector<32x256xf32>
    %44 = arith.mulf %42, %43 : vector<32x256xf32>
    %45 = arith.addf %39, %44 : vector<32x256xf32>
    %46 = vector.extract_strided_slice %0 {offsets = [0, 2], sizes = [32, 1], strides = [1, 1]} : vector<32x4xf32> to vector<32x1xf32>
    %47 = vector.extract_strided_slice %34 {offsets = [2, 0], sizes = [1, 256], strides = [1, 1]} : vector<4x256xf32> to vector<1x256xf32>
    %48 = vector.broadcast %46 : vector<32x1xf32> to vector<32x256xf32>
    %49 = vector.broadcast %47 : vector<1x256xf32> to vector<32x256xf32>
    %50 = arith.mulf %48, %49 : vector<32x256xf32>
    %51 = arith.addf %45, %50 : vector<32x256xf32>
    %52 = vector.extract_strided_slice %0 {offsets = [0, 3], sizes = [32, 1], strides = [1, 1]} : vector<32x4xf32> to vector<32x1xf32>
    %53 = vector.extract_strided_slice %34 {offsets = [3, 0], sizes = [1, 256], strides = [1, 1]} : vector<4x256xf32> to vector<1x256xf32>
    %54 = vector.broadcast %52 : vector<32x1xf32> to vector<32x256xf32>
    %55 = vector.broadcast %53 : vector<1x256xf32> to vector<32x256xf32>
    %56 = arith.mulf %54, %55 : vector<32x256xf32>
    %57 = arith.addf %51, %56 : vector<32x256xf32>
    %58 = vector.broadcast %1 : vector<32x1xf32> to vector<32x256xf32>
    %59 = arith.addf %57, %58 : vector<32x256xf32>
    %cst_8 = arith.constant 0.000000e+00 : f32
    %60 = vector.broadcast %cst_8 : f32 to vector<32x256xf32>
    %61 = arith.maximumf %59, %60 : vector<32x256xf32>
    %cst_9 = arith.constant dense<0.000000e+00> : vector<32xf32>
    %62 = vector.multi_reduction <add>, %61, %cst_9 [1] : vector<32x256xf32> to vector<32xf32>
    %63 = vector.shape_cast %62 : vector<32xf32> to vector<32x1xf32>
    %cst_10 = arith.constant 2.560000e+02 : f32
    %64 = vector.broadcast %cst_10 : f32 to vector<32x1xf32>
    %65 = arith.divf %63, %64 : vector<32x1xf32>
    %66 = tpu.concatenate %33, %65 in 1 : vector<32x1xf32>, vector<32x1xf32> -> vector<32x2xf32>
    %c0_11 = arith.constant 0 : index
    %c0_12 = arith.constant 0 : index
    %67 = vector.load %arg4[%c0_11, %c0_12] : memref<8x32xf32, #tpu.memory_space<vmem>>, vector<8x32xf32>
    %cst_13 = arith.constant dense<0.000000e+00> : vector<2x8xf32>
    %68 = tpu.matmul %66, %67, %cst_13 {dimension_numbers = #tpu.dot_dimension_numbers<[0], [1], [1], [0], [0, 1, 1, 0], [], []>} : vector<32x2xf32>, vector<8x32xf32>, vector<2x8xf32> -> vector<2x8xf32>
    %c0_14 = arith.constant 0 : index
    %c0_15 = arith.constant 0 : index
    %69 = vector.load %arg5[%c0_14, %c0_15] : memref<1x8xf32, #tpu.memory_space<vmem>>, vector<1x8xf32>
    %70 = vector.broadcast %69 : vector<1x8xf32> to vector<2x8xf32>
    %71 = arith.addf %68, %70 : vector<2x8xf32>
    %c0_16 = arith.constant 0 : index
    %c0_17 = arith.constant 0 : index
    %72 = vector.load %arg6[%c0_16, %c0_17] : memref<2x8xf32, #tpu.memory_space<vmem>>, vector<2x8xf32>
    tpu.vector_store %arg6[%c0_16, %c0_17], %71 {strides = array<i32>} : memref<2x8xf32, #tpu.memory_space<vmem>>, vector<2x8xf32>,
    return
  }
  func.func @transform_0(%arg0: i32) -> (i32, i32) {
    %c0_i32 = arith.constant 0 : i32
    %c0_i32_0 = arith.constant 0 : i32
    %c0_i32_1 = arith.constant 0 : i32
    return %c0_i32, %c0_i32_0 : i32, i32
  }
  func.func @transform_1(%arg0: i32) -> (i32, i32) {
    %c0_i32 = arith.constant 0 : i32
    %c0_i32_0 = arith.constant 0 : i32
    %c0_i32_1 = arith.constant 0 : i32
    return %c0_i32, %c0_i32_0 : i32, i32
  }
  func.func @transform_2(%arg0: i32) -> (i32, i32) {
    %c0_i32 = arith.constant 0 : i32
    %c0_i32_0 = arith.constant 0 : i32
    %c0_i32_1 = arith.constant 0 : i32
    return %c0_i32, %c0_i32_0 : i32, i32
  }
  func.func @transform_3(%arg0: i32) -> (i32, i32) {
    %c0_i32 = arith.constant 0 : i32
    %c0_i32_0 = arith.constant 0 : i32
    %c0_i32_1 = arith.constant 0 : i32
    return %c0_i32, %c0_i32_0 : i32, i32
  }
  func.func @transform_4(%arg0: i32) -> (i32, i32) {
    %c0_i32 = arith.constant 0 : i32
    %c0_i32_0 = arith.constant 0 : i32
    %c0_i32_1 = arith.constant 0 : i32
    return %c0_i32, %c0_i32_0 : i32, i32
  }
  func.func @transform_5(%arg0: i32) -> (i32, i32) {
    %c0_i32 = arith.constant 0 : i32
    %c0_i32_0 = arith.constant 0 : i32
    %c0_i32_1 = arith.constant 0 : i32
    return %c0_i32, %c0_i32_0 : i32, i32
  }
}

</mosaic_0001>

<llo_original>
// kernel: tpu_custom_call.1
$region0: #{tpu_custom_call.1}
  #allocation0 [shape = 'u32[]', space=smem, size = 0x4, offset = 0x4, fixed_abs, tag = 'smem constant byte address 0x4 - core index']
  #allocation1 [shape = 'u32[144,128]{1,0:T(1,128)}', space=vmem, size = 0x12000, scoped, tag = 'internal scratch']
  %s0 = inlined_call_operand.vmem [shape: f32[8,256], index: 0, kind: input, shape index: {}]
  %s1 = inlined_call_operand.vmem [shape: f32[32,4], index: 1, kind: input, shape index: {}]
  %s2 = inlined_call_operand.vmem [shape: f32[32,1], index: 2, kind: input, shape index: {}]
  %s3 = inlined_call_operand.vmem [shape: f32[8,32], index: 3, kind: input, shape index: {}]
  %s4 = inlined_call_operand.vmem [shape: f32[1,8], index: 4, kind: input, shape index: {}]
  %s5 = inlined_call_operand.hbm [shape: f32[2,8], index: 5, kind: output, shape index: {}]
  %s6 = sld [smem:[#allocation0]]
  $region30: #{tpu_custom_call.1} parent=0
    _
  %s8 = ssub.s32 1, %s6
  %s9 = scalar_select 0, %s8, %s6
  $region1: #{tpu_custom_call.1} parent=0
    #allocation2 [shape = 'u8[1024]{0}', space=vmem, size = 0x400, scoped, tag = 'output window, operand 0, single buffered']
    #allocation3 [shape = 's32[1]{0}', space=sflag, size = 0x4, scoped, tag = 'scoped memory for tpu_custom_call.1']
    %10 = vsyncpa [#allocation3], 0
    // Predicated region
    $region2: #{tpu_custom_call.1} parent=1 // pred_check
      _
    $region3: #{tpu_custom_call.1} parent=1 // pred_check_branch
      %12 = sbr.rel (0) target = $region5
    $region4: #{tpu_custom_call.1} parent=1 // pred_region
      _
    $region5: #{tpu_custom_call.1} parent=1 // pred_fallthru
      _
    // Predicated region
    $region6: #{tpu_custom_call.1} parent=1 // pred_check
      _
    $region7: #{tpu_custom_call.1} parent=1 // pred_check_branch
      %14 = sbr.rel (0) target = $region9
    $region8: #{tpu_custom_call.1} parent=1 // pred_region
      _
    $region9: #{tpu_custom_call.1} parent=1 // pred_fallthru
      _
    // Predicated region
    $region10: #{tpu_custom_call.1} parent=1 // pred_check
      _
    $region11: #{tpu_custom_call.1} parent=1 // pred_check_branch
      %16 = sbr.rel (0) target = $region13
    $region12: #{tpu_custom_call.1} parent=1 // pred_region
      _
    $region13: #{tpu_custom_call.1} parent=1 // pred_fallthru
      _
    // Predicated region
    $region14: #{tpu_custom_call.1} parent=1 // pred_check
      _
    $region15: #{tpu_custom_call.1} parent=1 // pred_check_branch
      %18 = sbr.rel (0) target = $region17
    $region16: #{tpu_custom_call.1} parent=1 // pred_region
      _
    $region17: #{tpu_custom_call.1} parent=1 // pred_fallthru
      _
    // Predicated region
    $region18: #{tpu_custom_call.1} parent=1 // pred_check
      _
    $region19: #{tpu_custom_call.1} parent=1 // pred_check_branch
      %20 = sbr.rel (0) target = $region21
    $region20: #{tpu_custom_call.1} parent=1 // pred_region
      _
    $region21: #{tpu_custom_call.1} parent=1 // pred_fallthru
      _
    %v21 = vld [vmem:[%s1] sm:$0xff]
    %v22 = vld [vmem:[%s1 + $0x8] sm:$0xff]
    %v23 = vld [vmem:[%s1 + $0x10] sm:$0xff]
    %v24 = vld [vmem:[%s1 + $0x18] sm:$0xff]
    %v25 = vld [vmem:[%s2] sm:$0xff]
    %v26 = vld [vmem:[%s2 + $0x8] sm:$0xff]
    %v27 = vld [vmem:[%s2 + $0x10] sm:$0xff]
    %v28 = vld [vmem:[%s2 + $0x18] sm:$0xff]
    %v29 = vld [vmem:[%s0] sm:$0xf]
    %v30 = vld [vmem:[%s0 + $0x8] sm:$0xf]
    %32 = vset.pattern.permute.xlu0 0
    %33 = vperm.xlu0 %32, %v21
    %v34 = vpop.permute.xlu0 %33
    %37 = vset.pattern.permute.xlu0 0
    %38 = vperm.xlu0 %37, %v22
    %v39 = vpop.permute.xlu0 %38
    %42 = vset.pattern.permute.xlu0 0
    %43 = vperm.xlu0 %42, %v23
    %v44 = vpop.permute.xlu0 %43
    %47 = vset.pattern.permute.xlu0 0
    %48 = vperm.xlu0 %47, %v24
    %v49 = vpop.permute.xlu0 %48
    %v51 = vlaneseq
    %v52 = vshrl.u32 %v51, 7
    %v53 = vsub.s32 0, %v52
    %v54 = vrot.slane %v29, %v53
    %v55 = vlaneseq
    %v56 = vshrl.u32 %v55, 7
    %v57 = vsub.s32 0, %v56
    %v58 = vrot.slane %v30, %v57
    %v59 = vmul.f32 %v34, %v54
    %v60 = vmul.f32 %v34, %v58
    %v61 = vmul.f32 %v39, %v54
    %v62 = vmul.f32 %v39, %v58
    %v63 = vmul.f32 %v44, %v54
    %v64 = vmul.f32 %v44, %v58
    %v65 = vmul.f32 %v49, %v54
    %v66 = vmul.f32 %v49, %v58
    %67 = vset.pattern.permute.xlu0 1
    %68 = vperm.xlu0 %67, %v21
    %v69 = vpop.permute.xlu0 %68
    %71 = vset.pattern.permute.xlu0 1
    %72 = vperm.xlu0 %71, %v22
    %v73 = vpop.permute.xlu0 %72
    %75 = vset.pattern.permute.xlu0 1
    %76 = vperm.xlu0 %75, %v23
    %v77 = vpop.permute.xlu0 %76
    %79 = vset.pattern.permute.xlu0 1
    %80 = vperm.xlu0 %79, %v24
    %v81 = vpop.permute.xlu0 %80
    %v83 = vlaneseq
    %v84 = vshrl.u32 %v83, 7
    %v85 = vsub.s32 1, %v84
    %v86 = vrot.slane %v29, %v85
    %v87 = vlaneseq
    %v88 = vshrl.u32 %v87, 7
    %v89 = vsub.s32 1, %v88
    %v90 = vrot.slane %v30, %v89
    %v91 = vmul.f32 %v69, %v86
    %v92 = vmul.f32 %v69, %v90
    %v93 = vmul.f32 %v73, %v86
    %v94 = vmul.f32 %v73, %v90
    %v95 = vmul.f32 %v77, %v86
    %v96 = vmul.f32 %v77, %v90
    %v97 = vmul.f32 %v81, %v86
    %v98 = vmul.f32 %v81, %v90
    %v99 = vadd.f32 %v59, %v91
    %v100 = vadd.f32 %v60, %v92
    %v101 = vadd.f32 %v61, %v93
    %v102 = vadd.f32 %v62, %v94
    %v103 = vadd.f32 %v63, %v95
    %v104 = vadd.f32 %v64, %v96
    %v105 = vadd.f32 %v65, %v97
    %v106 = vadd.f32 %v66, %v98
    %107 = vset.pattern.permute.xlu0 2
    %108 = vperm.xlu0 %107, %v21
    %v109 = vpop.permute.xlu0 %108
    %111 = vset.pattern.permute.xlu0 2
    %112 = vperm.xlu0 %111, %v22
    %v113 = vpop.permute.xlu0 %112
    %115 = vset.pattern.permute.xlu0 2
    %116 = vperm.xlu0 %115, %v23
    %v117 = vpop.permute.xlu0 %116
    %119 = vset.pattern.permute.xlu0 2
    %120 = vperm.xlu0 %119, %v24
    %v121 = vpop.permute.xlu0 %120
    %v123 = vlaneseq
    %v124 = vshrl.u32 %v123, 7
    %v125 = vsub.s32 2, %v124
    %v126 = vrot.slane %v29, %v125
    %v127 = vlaneseq
    %v128 = vshrl.u32 %v127, 7
    %v129 = vsub.s32 2, %v128
    %v130 = vrot.slane %v30, %v129
    %v131 = vmul.f32 %v109, %v126
    %v132 = vmul.f32 %v109, %v130
    %v133 = vmul.f32 %v113, %v126
    %v134 = vmul.f32 %v113, %v130
    %v135 = vmul.f32 %v117, %v126
    %v136 = vmul.f32 %v117, %v130
    %v137 = vmul.f32 %v121, %v126
    %v138 = vmul.f32 %v121, %v130
    %v139 = vadd.f32 %v99, %v131
    %v140 = vadd.f32 %v100, %v132
    %v141 = vadd.f32 %v101, %v133
    %v142 = vadd.f32 %v102, %v134
    %v143 = vadd.f32 %v103, %v135
    %v144 = vadd.f32 %v104, %v136
    %v145 = vadd.f32 %v105, %v137
    %v146 = vadd.f32 %v106, %v138
    %147 = vset.pattern.permute.xlu0 3
    %148 = vperm.xlu0 %147, %v21
    %v149 = vpop.permute.xlu0 %148
    %151 = vset.pattern.permute.xlu0 3
    %152 = vperm.xlu0 %151, %v22
    %v153 = vpop.permute.xlu0 %152
    %155 = vset.pattern.permute.xlu0 3
    %156 = vperm.xlu0 %155, %v23
    %v157 = vpop.permute.xlu0 %156
    %159 = vset.pattern.permute.xlu0 3
    %160 = vperm.xlu0 %159, %v24
    %v161 = vpop.permute.xlu0 %160
    %v163 = vlaneseq
    %v164 = vshrl.u32 %v163, 7
    %v165 = vsub.s32 3, %v164
    %v166 = vrot.slane %v29, %v165
    %v167 = vlaneseq
    %v168 = vshrl.u32 %v167, 7
    %v169 = vsub.s32 3, %v168
    %v170 = vrot.slane %v30, %v169
    %v171 = vmul.f32 %v149, %v166
    %v172 = vmul.f32 %v149, %v170
    %v173 = vmul.f32 %v153, %v166
    %v174 = vmul.f32 %v153, %v170
    %v175 = vmul.f32 %v157, %v166
    %v176 = vmul.f32 %v157, %v170
    %v177 = vmul.f32 %v161, %v166
    %v178 = vmul.f32 %v161, %v170
    %v179 = vadd.f32 %v139, %v171
    %v180 = vadd.f32 %v140, %v172
    %v181 = vadd.f32 %v141, %v173
    %v182 = vadd.f32 %v142, %v174
    %v183 = vadd.f32 %v143, %v175
    %v184 = vadd.f32 %v144, %v176
    %v185 = vadd.f32 %v145, %v177
    %v186 = vadd.f32 %v146, %v178
    %188 = vset.pattern.permute.xlu0 0
    %189 = vperm.xlu0 %188, %v25
    %v190 = vpop.permute.xlu0 %189
    %193 = vset.pattern.permute.xlu0 0
    %194 = vperm.xlu0 %193, %v26
    %v195 = vpop.permute.xlu0 %194
    %198 = vset.pattern.permute.xlu0 0
    %199 = vperm.xlu0 %198, %v27
    %v200 = vpop.permute.xlu0 %199
    %203 = vset.pattern.permute.xlu0 0
    %204 = vperm.xlu0 %203, %v28
    %v205 = vpop.permute.xlu0 %204
    %v207 = vadd.f32 %v179, %v190
    %v208 = vadd.f32 %v180, %v190
    %v209 = vadd.f32 %v181, %v195
    %v210 = vadd.f32 %v182, %v195
    %v211 = vadd.f32 %v183, %v200
    %v212 = vadd.f32 %v184, %v200
    %v213 = vadd.f32 %v185, %v205
    %v214 = vadd.f32 %v186, %v205
    %v215 = vmax.f32 %v207, 0.0
    %v216 = vmax.f32 %v208, 0.0
    %v217 = vmax.f32 %v209, 0.0
    %v218 = vmax.f32 %v210, 0.0
    %v219 = vmax.f32 %v211, 0.0
    %v220 = vmax.f32 %v212, 0.0
    %v221 = vmax.f32 %v213, 0.0
    %v222 = vmax.f32 %v214, 0.0
    %v223 = vadd.f32 %v215, %v216
    %224 = vadd.xlane.f32.xlu0 %v223
    %v225 = vpop.xlane.xlu0 %224
    %v226 = vadd.f32 %v217, %v218
    %227 = vadd.xlane.f32.xlu0 %v226
    %v228 = vpop.xlane.xlu0 %227
    %v229 = vadd.f32 %v219, %v220
    %230 = vadd.xlane.f32.xlu0 %v229
    %v231 = vpop.xlane.xlu0 %230
    %v232 = vadd.f32 %v221, %v222
    %233 = vadd.xlane.f32.xlu0 %v232
    %v234 = vpop.xlane.xlu0 %233
    %v235 = vrcp.pop 256.0
    %v236 = vmul.f32 %v225, %v235
    %v237 = vmul.f32 %v228, %v235
    %v238 = vmul.f32 %v231, %v235
    %v239 = vmul.f32 %v234, %v235
    %v240 = vld [vmem:[%s0] sm:$0xf0]
    %v241 = vld [vmem:[%s0 + $0x8] sm:$0xf0]
    %v242 = vlaneseq
    %v243 = vshrl.u32 %v242, 7
    %v244 = vsub.s32 4, %v243
    %v245 = vrot.slane %v240, %v244
    %v246 = vlaneseq
    %v247 = vshrl.u32 %v246, 7
    %v248 = vsub.s32 4, %v247
    %v249 = vrot.slane %v241, %v248
    %v250 = vmul.f32 %v34, %v245
    %v251 = vmul.f32 %v34, %v249
    %v252 = vmul.f32 %v39, %v245
    %v253 = vmul.f32 %v39, %v249
    %v254 = vmul.f32 %v44, %v245
    %v255 = vmul.f32 %v44, %v249
    %v256 = vmul.f32 %v49, %v245
    %v257 = vmul.f32 %v49, %v249
    %v258 = vlaneseq
    %v259 = vshrl.u32 %v258, 7
    %v260 = vsub.s32 5, %v259
    %v261 = vrot.slane %v240, %v260
    %v262 = vlaneseq
    %v263 = vshrl.u32 %v262, 7
    %v264 = vsub.s32 5, %v263
    %v265 = vrot.slane %v241, %v264
    %v266 = vmul.f32 %v69, %v261
    %v267 = vmul.f32 %v69, %v265
    %v268 = vmul.f32 %v73, %v261
    %v269 = vmul.f32 %v73, %v265
    %v270 = vmul.f32 %v77, %v261
    %v271 = vmul.f32 %v77, %v265
    %v272 = vmul.f32 %v81, %v261
    %v273 = vmul.f32 %v81, %v265
    %v274 = vadd.f32 %v250, %v266
    %v275 = vadd.f32 %v251, %v267
    %v276 = vadd.f32 %v252, %v268
    %v277 = vadd.f32 %v253, %v269
    %v278 = vadd.f32 %v254, %v270
    %v279 = vadd.f32 %v255, %v271
    %v280 = vadd.f32 %v256, %v272
    %v281 = vadd.f32 %v257, %v273
    %v282 = vlaneseq
    %v283 = vshrl.u32 %v282, 7
    %v284 = vsub.s32 6, %v283
    %v285 = vrot.slane %v240, %v284
    %v286 = vlaneseq
    %v287 = vshrl.u32 %v286, 7
    %v288 = vsub.s32 6, %v287
    %v289 = vrot.slane %v241, %v288
    %v290 = vmul.f32 %v109, %v285
    %v291 = vmul.f32 %v109, %v289
    %v292 = vmul.f32 %v113, %v285
    %v293 = vmul.f32 %v113, %v289
    %v294 = vmul.f32 %v117, %v285
    %v295 = vmul.f32 %v117, %v289
    %v296 = vmul.f32 %v121, %v285
    %v297 = vmul.f32 %v121, %v289
    %v298 = vadd.f32 %v274, %v290
    %v299 = vadd.f32 %v275, %v291
    %v300 = vadd.f32 %v276, %v292
    %v301 = vadd.f32 %v277, %v293
    %v302 = vadd.f32 %v278, %v294
    %v303 = vadd.f32 %v279, %v295
    %v304 = vadd.f32 %v280, %v296
    %v305 = vadd.f32 %v281, %v297
    %v306 = vlaneseq
    %v307 = vshrl.u32 %v306, 7
    %v308 = vsub.s32 7, %v307
    %v309 = vrot.slane %v240, %v308
    %v310 = vlaneseq
    %v311 = vshrl.u32 %v310, 7
    %v312 = vsub.s32 7, %v311
    %v313 = vrot.slane %v241, %v312
    %v314 = vmul.f32 %v149, %v309
    %v315 = vmul.f32 %v149, %v313
    %v316 = vmul.f32 %v153, %v309
    %v317 = vmul.f32 %v153, %v313
    %v318 = vmul.f32 %v157, %v309
    %v319 = vmul.f32 %v157, %v313
    %v320 = vmul.f32 %v161, %v309
    %v321 = vmul.f32 %v161, %v313
    %v322 = vadd.f32 %v298, %v314
    %v323 = vadd.f32 %v299, %v315
    %v324 = vadd.f32 %v300, %v316
    %v325 = vadd.f32 %v301, %v317
    %v326 = vadd.f32 %v302, %v318
    %v327 = vadd.f32 %v303, %v319
    %v328 = vadd.f32 %v304, %v320
    %v329 = vadd.f32 %v305, %v321
    %v330 = vadd.f32 %v322, %v190
    %v331 = vadd.f32 %v323, %v190
    %v332 = vadd.f32 %v324, %v195
    %v333 = vadd.f32 %v325, %v195
    %v334 = vadd.f32 %v326, %v200
    %v335 = vadd.f32 %v327, %v200
    %v336 = vadd.f32 %v328, %v205
    %v337 = vadd.f32 %v329, %v205
    %v338 = vmax.f32 %v330, 0.0
    %v339 = vmax.f32 %v331, 0.0
    %v340 = vmax.f32 %v332, 0.0
    %v341 = vmax.f32 %v333, 0.0
    %v342 = vmax.f32 %v334, 0.0
    %v343 = vmax.f32 %v335, 0.0
    %v344 = vmax.f32 %v336, 0.0
    %v345 = vmax.f32 %v337, 0.0
    %v346 = vadd.f32 %v338, %v339
    %347 = vadd.xlane.f32.xlu0 %v346
    %v348 = vpop.xlane.xlu0 %347
    %v349 = vadd.f32 %v340, %v341
    %350 = vadd.xlane.f32.xlu0 %v349
    %v351 = vpop.xlane.xlu0 %350
    %v352 = vadd.f32 %v342, %v343
    %353 = vadd.xlane.f32.xlu0 %v352
    %v354 = vpop.xlane.xlu0 %353
    %v355 = vadd.f32 %v344, %v345
    %356 = vadd.xlane.f32.xlu0 %v355
    %v357 = vpop.xlane.xlu0 %356
    %v358 = vmul.f32 %v348, %v235
    %v359 = vmul.f32 %v351, %v235
    %v360 = vmul.f32 %v354, %v235
    %v361 = vmul.f32 %v357, %v235
    %vm362 = vcmask 7168
    %v363 = vsel %vm362, %v236, %v358
    %v364 = vsel %vm362, %v237, %v359
    %v365 = vsel %vm362, %v238, %v360
    %v366 = vsel %vm362, %v239, %v361
    %v367 = vld [vmem:[%s3] sm:$0xff]
    %v368 = vld [vmem:[%s4] sm:$0x1]
    %v370 = vlaneseq
    %v371 = vshrl.u32 %v370, 7
    %v372 = vsub.s32 0, %v371
    %v373 = vrot.slane %v368, %v372
    %375 = vxpose.xlu0.b32.start [1/16] %v363, 128
    %376 = vxpose.xlu0.b32.cont [2/16] %v364, 128
    %377 = vxpose.xlu0.b32.cont [3/16] %v365, 128
    %378 = vxpose.xlu0.b32.cont [4/16] %v366, 128
    %379 = vxpose.xlu0.b32.cont [5/16] 0.0, 128
    %380 = vxpose.xlu0.b32.cont [6/16] 0.0, 128
    %381 = vxpose.xlu0.b32.cont [7/16] 0.0, 128
    %382 = vxpose.xlu0.b32.cont [8/16] 0.0, 128
    %383 = vxpose.xlu0.b32.cont [9/16] 0.0, 128
    %384 = vxpose.xlu0.b32.cont [10/16] 0.0, 128
    %385 = vxpose.xlu0.b32.cont [11/16] 0.0, 128
    %386 = vxpose.xlu0.b32.cont [12/16] 0.0, 128
    %387 = vxpose.xlu0.b32.cont [13/16] 0.0, 128
    %388 = vxpose.xlu0.b32.cont [14/16] 0.0, 128
    %389 = vxpose.xlu0.b32.cont [15/16] 0.0, 128
    %390 = vxpose.xlu0.b32.end [16/16] 0.0, 128
    %v391 = vpop.trf.xlu0
    %v392 = vpop.trf.xlu0
    %v393 = vpop.trf.xlu0
    %v394 = vpop.trf.xlu0
    %v395 = vpop.trf.xlu0
    %v396 = vpop.trf.xlu0
    %v397 = vpop.trf.xlu0
    %v398 = vpop.trf.xlu0
    %v399 = vpop.trf.xlu0
    %v400 = vpop.trf.xlu0
    %v401 = vpop.trf.xlu0
    %v402 = vpop.trf.xlu0
    %v403 = vpop.trf.xlu0
    %v404 = vpop.trf.xlu0
    %v405 = vpop.trf.xlu0
    %v406 = vpop.trf.xlu0
    %vm407 = vcmask 261120
    %v409 = vsel %vm407, %v391, 0
    %v412 = vsel %vm407, %v367, 0
    %414 = vmatprep.subr.mxu0 0.0
    %415 = vmatpush1.xpose.msra.mxu0 0.0
    %416 = vmatprep.subr.mxu0 0.0
    %417 = vmatpush1.xpose.msra.mxu0 0.0
    %418 = vmatprep.subr.mxu0 0.0
    %419 = vmatpush1.xpose.msra.mxu0 0.0
    %420 = vmatprep.subr.mxu0 0.0
    %421 = vmatpush1.xpose.msra.mxu0 0.0
    %422 = vmatprep.subr.mxu0 0.0
    %423 = vmatpush1.xpose.msra.mxu0 0.0
    %424 = vmatprep.subr.mxu0 0.0
    %425 = vmatpush1.xpose.msra.mxu0 0.0
    %426 = vmatprep.subr.mxu0 0.0
    %427 = vmatpush1.xpose.msra.mxu0 0.0
    %428 = vmatprep.subr.mxu0 0.0
    %429 = vmatpush1.xpose.msra.mxu0 0.0
    %430 = vmatprep.subr.mxu0 0.0
    %431 = vmatpush1.xpose.msra.mxu0 0.0
    %432 = vmatprep.subr.mxu0 0.0
    %433 = vmatpush1.xpose.msra.mxu0 0.0
    %434 = vmatprep.subr.mxu0 0.0
    %435 = vmatpush1.xpose.msra.mxu0 0.0
    %436 = vmatprep.subr.mxu0 0.0
    %437 = vmatpush1.xpose.msra.mxu0 0.0
    %438 = vmatprep.subr.mxu0 0.0
    %439 = vmatpush1.xpose.msra.mxu0 0.0
    %440 = vmatprep.subr.mxu0 0.0
    %441 = vmatpush1.xpose.msra.mxu0 0.0
    %442 = vmatprep.subr.mxu0 0.0
    %443 = vmatpush1.xpose.msra.mxu0 0.0
    %444 = vmatprep.subr.mxu0 0.0
    %445 = vmatpush1.xpose.msra.mxu0 %v412
    %446 = vmatprep.subr.mxu0 0.0
    %447 = vmatpush2.xpose.msra.mxu0 0.0
    %448 = vmatprep.subr.mxu0 0.0
    %449 = vmatpush2.xpose.msra.mxu0 0.0
    %450 = vmatprep.subr.mxu0 0.0
    %451 = vmatpush2.xpose.msra.mxu0 0.0
    %452 = vmatprep.subr.mxu0 0.0
    %453 = vmatpush2.xpose.msra.mxu0 0.0
    %454 = vmatprep.subr.mxu0 0.0
    %455 = vmatpush2.xpose.msra.mxu0 0.0
    %456 = vmatprep.subr.mxu0 0.0
    %457 = vmatpush2.xpose.msra.mxu0 0.0
    %458 = vmatprep.subr.mxu0 0.0
    %459 = vmatpush2.xpose.msra.mxu0 0.0
    %460 = vmatprep.subr.mxu0 0.0
    %461 = vmatpush2.xpose.msra.mxu0 0.0
    %462 = vmatprep.subr.mxu0 0.0
    %463 = vmatpush2.xpose.msra.mxu0 0.0
    %464 = vmatprep.subr.mxu0 0.0
    %465 = vmatpush2.xpose.msra.mxu0 0.0
    %466 = vmatprep.subr.mxu0 0.0
    %467 = vmatpush2.xpose.msra.mxu0 0.0
    %468 = vmatprep.subr.mxu0 0.0
    %469 = vmatpush2.xpose.msra.mxu0 0.0
    %470 = vmatprep.subr.mxu0 0.0
    %471 = vmatpush2.xpose.msra.mxu0 0.0
    %472 = vmatprep.subr.mxu0 0.0
    %473 = vmatpush2.xpose.msra.mxu0 0.0
    %474 = vmatprep.subr.mxu0 0.0
    %475 = vmatpush2.xpose.msra.mxu0 0.0
    %476 = vmatprep.subr.mxu0 0.0
    %477 = vmatpush2.xpose.msra.mxu0 0.0
    %478 = vmatprep.mubr.f32.mxu0 0.0
    %479 = vmatmul.mubr.f32.gmra.mxu0 %v409
    %v480 = vpop.f32.mrf.mxu0
    %v481 = vadd.f32 %v373, %v480
    %v482 = vpop.f32.mrf.mxu0
    %483 = vdwg.mxu0
    %vm484 = vcmask 58368
    %485 = vst.msk [vmem:[#allocation2] sm:$0x3] %vm484, %v481
    // Predicated region
    $region22: #{tpu_custom_call.1} parent=1 // pred_check
      _
    $region23: #{tpu_custom_call.1} parent=1 // pred_check_branch
      %487 = sbr.rel (0) target = $region25
    $region24: #{tpu_custom_call.1} parent=1 // pred_region
      %s489 = ssub.s32 32, 32
      %490 = vsyncadd [#allocation3], %s489
      %s492 = sshll.u32 [#allocation2], 4
      %s493 = int_to_ptr.vmem [resolvable:$true] %s492
      %495 = dma.vmem_to_hbm [thread:$0]  %s493, 32, %s5, [#allocation3]
    $region25: #{tpu_custom_call.1} parent=1 // pred_fallthru
      _
    // Predicated region
    $region26: #{tpu_custom_call.1} parent=1 // pred_check
      _
    $region27: #{tpu_custom_call.1} parent=1 // pred_check_branch
      %497 = sbr.rel (0) target = $region29
    $region28: #{tpu_custom_call.1} parent=1 // pred_region
      %498 = dma.done [#allocation3], 32
    $region29: #{tpu_custom_call.1} parent=1 // pred_fallthru
      _
    %499 = vsyncpa [#allocation3], 1

</llo_original>
